<compile_context>
chip_gen: v6e
topology: v6e:2x2x1
jax: 0.10.0
libtpu: 0.0.40
codegen_flags: <defaults>
</compile_context>

<pallas_src>
import functools
import math

import jax
import jax.numpy as jnp
from jax.experimental import pallas as pl
from jax.experimental.pallas import tpu as pltpu


def _patch_merge_kernel(x_ref, w_ref, c_ref, o_ref, *, eps):
    """Fused 2x2 merge + LayerNorm(4C) + Linear(4C -> 2C), LN applied post-matmul.

    x_ref: (th, 2, Wo, 2C)   th input row-pairs; slab hi holds [wi=0 C | wi=1 C]
    w_ref: (2, 2C, 2Cout)    gamma-folded, slab-permuted reduction weight
                             (w_ref[0] multiplies the hi=0 slab, w_ref[1] the hi=1 slab)
    c_ref: (2, 2Cout) f32    row 0: colsum(W')    row 1: beta @ W.T (folded bias)
    o_ref: (th*Wo, 2Cout)
    """
    th, _, wo, c2 = x_ref.shape          # c2 = 2C
    rows = th * wo
    inv_n = 1.0 / (2 * c2)               # 1 / (4C)

    # Load the two hi slabs straight from the ref (no 4-D block materialisation).
    # The (th, Wo, 2C) -> (th*Wo, 2C) collapse is layout-preserving when
    # Wo % 8 == 0; otherwise it costs one relayout of the weight-dtype slab
    # (needed for the MXU anyway), never of the f32 temporaries.
    top = x_ref[:, 0].reshape(rows, c2)          # hi=0 slab: [x0 | x2]
    bot = x_ref[:, 1].reshape(rows, c2)          # hi=1 slab: [x1 | x3]

    # LayerNorm stats over the full 4C group in ONE pass (sum + sum-of-squares),
    # f32 on the VPU.
    tf = top.astype(jnp.float32)
    bf = bot.astype(jnp.float32)
    s = jnp.sum(tf, axis=-1, keepdims=True) + jnp.sum(bf, axis=-1, keepdims=True)
    ssq = (jnp.sum(tf * tf, axis=-1, keepdims=True)
           + jnp.sum(bf * bf, axis=-1, keepdims=True))
    mu = s * inv_n
    var = ssq * inv_n - mu * mu
    inv = jax.lax.rsqrt(var + eps)

    # Raw activations go to the MXU in the weight dtype (bf16 stays bf16, f32
    # stays f32) with f32 accumulation.  The LayerNorm center/scale is applied
    # on the 2x narrower f32 accumulator:
    #   ((x - mu) * inv) @ W'  ==  (x @ W' - mu * colsum(W')) * inv
    wdt = w_ref.dtype
    acc = jnp.dot(top.astype(wdt), w_ref[0], preferred_element_type=jnp.float32)
    acc = acc + jnp.dot(bot.astype(wdt), w_ref[1], preferred_element_type=jnp.float32)

    col_sum = c_ref[0:1, :]                       # (1, 2Cout) f32
    bias = c_ref[1:2, :]                          # (1, 2Cout) f32
    o_ref[...] = ((acc - mu * col_sum) * inv + bias).astype(o_ref.dtype)


_BUFFERED_CONST = None


def _const_pipeline_supported():
    """Probe once whether BlockSpec(pipeline_mode=pl.Buffered(1)) lowers here."""
    global _BUFFERED_CONST
    if _BUFFERED_CONST is None:
        try:
            def k(x_ref, o_ref):
                o_ref[...] = x_ref[...] + 1.0

            spec = pl.BlockSpec((8, 128), lambda i: (0, 0),
                                pipeline_mode=pl.Buffered(1))
            jax.block_until_ready(pl.pallas_call(
                k,
                out_shape=jax.ShapeDtypeStruct((8, 128), jnp.float32),
                grid=(2,),
                in_specs=[spec],
                out_specs=pl.BlockSpec((8, 128), lambda i: (0, 0)),
            )(jnp.zeros((8, 128), jnp.float32)))
            _BUFFERED_CONST = True
        except Exception:
            _BUFFERED_CONST = False
    return _BUFFERED_CONST


def _vmem_capacity_bytes(default_bytes=64 << 20):
    """Per-core VMEM capacity; falls back to the smallest (v7x) size."""
    try:
        cap = getattr(pltpu.get_tpu_info(), "vmem_capacity_bytes", None)
        if cap:
            return int(cap)
    except Exception:
        pass
    return default_bytes


def patch_merging(x, gamma, beta, w_reduction, *, eps=1e-5,
                  vmem_limit_bytes=None, tile_vmem_bytes=None):
    """Pallas implementation of Swin PatchMerging.forward.

    x:           [..., H, W, C]
    gamma, beta: [4*C]          (LayerNorm affine params)
    w_reduction: [2*C, 4*C]     (torch nn.Linear weight layout: (out, in))
    returns      [..., ceil(H/2), ceil(W/2), 2*C]
    """
    *lead, H, W, C = x.shape
    pad_h, pad_w = H % 2, W % 2
    if pad_h or pad_w:
        # TODO(synk): odd H/W needs one HBM pad copy; the common even-dim Swin
        # case below is copy-free.
        x = jnp.pad(x, [(0, 0)] * len(lead) + [(0, pad_h), (0, pad_w), (0, 0)])
    Hp, Wp = H + pad_h, W + pad_w
    Ho, Wo = Hp // 2, Wp // 2
    B = 1
    for d in lead:
        B *= d
    c2, c_out = 2 * C, 2 * C

    # Free row-major reshape: row r=(b,ho), slab hi, column wi*C + c:
    #   xr[r, hi, wo, wi*C + c] == x[b, 2*ho + hi, 2*wo + wi, c]
    xr = x.reshape(B * Ho, 2, Wo, c2)

    # Fold the LayerNorm affine into the (tiny) reduction weight, wrapper-side,
    # and permute the torch concat order [x0|x1|x2|x3] into slab order.
    w_t = w_reduction.T.astype(jnp.float32)                       # (4C, 2Cout)
    w_fold = w_t * gamma.astype(jnp.float32)[:, None]
    w_top = jnp.concatenate([w_fold[0:C], w_fold[2 * C:3 * C]], axis=0)      # [x0; x2]
    w_bot = jnp.concatenate([w_fold[C:2 * C], w_fold[3 * C:4 * C]], axis=0)  # [x1; x3]
    w_stk = jnp.stack([w_top, w_bot]).astype(w_reduction.dtype)   # (2, 2C, 2Cout)
    # Post-matmul LN constants: colsum of the SAME matrix the MXU sees (so the
    # algebraic identity is exact in the weight dtype), plus the folded bias.
    col_sum = jnp.sum(w_stk.astype(jnp.float32), axis=(0, 1))     # (2Cout,)
    bias = beta.astype(jnp.float32) @ w_t                         # (2Cout,)
    consts = jnp.stack([col_sum, bias]).astype(jnp.float32)       # (2, 2Cout)

    # ----- VMEM-bounded tile sizing ------------------------------------------
    n_rows = B * Ho
    sz_x = jnp.dtype(x.dtype).itemsize
    sz_w = jnp.dtype(w_stk.dtype).itemsize

    cap = _vmem_capacity_bytes()
    if vmem_limit_bytes is None:
        # ~80% of physical VMEM as the compiler limit (~100 MiB on v5e/v6e,
        # ~51 MiB on v7x) leaving headroom for compiler-internal scratch.
        vmem_limit_bytes = min(int(cap * 0.80), cap - (8 << 20))
    if tile_vmem_bytes is None:
        # Size tiles against ~65% of the limit; the per-row accounting below is
        # an estimate, so keep extra slack.
        tile_vmem_bytes = int(vmem_limit_bytes * 0.65)

    const_once = _const_pipeline_supported()

    row_in = 2 * Wo * c2               # input elements per th unit (= Wo * 4C)
    row_out = Wo * c_out
    bytes_per_th = (
        2 * row_in * sz_x              # input block, double-buffered
        + 2 * row_out * sz_x           # output block, double-buffered
        + row_in * (sz_x + 8 + sz_w)   # live slabs + f32 stat temps + MXU-dtype copies
        + row_out * 8                  # f32 accumulator + corrected result
    )
    w_bufs = 1 if const_once else 2
    fixed_bytes = (w_bufs * 2 * c2 * c_out * sz_w            # reduction weight block(s)
                   + w_bufs * 8 * max(c_out, 128) * 4)       # consts, tile-padded
    th = max(1, (tile_vmem_bytes - fixed_bytes) // bytes_per_th)

    # Keep >= 2 grid steps so ("parallel",) shards across both v7x TensorCores.
    th = min(th, max(1, pl.cdiv(n_rows, 2)), n_rows)
    if th < n_rows:
        # th*Wo must be a multiple of the packed sublane tile for the output
        # dtype (8 rows per 32-bit tile, x2 for bf16, x4 for 8-bit dtypes) so
        # the flat output block stores unmasked full sublanes.
        packing = max(1, 4 // sz_x)
        mult = (8 * packing) // math.gcd(8 * packing, Wo)
        th = max(mult, (th // mult) * mult)
        th = min(th, n_rows)
    grid = (pl.cdiv(n_rows, th),)

    if const_once:
        w_spec = pl.BlockSpec((2, c2, c_out), lambda i: (0, 0, 0),
                              pipeline_mode=pl.Buffered(1))
        c_spec = pl.BlockSpec((2, c_out), lambda i: (0, 0),
                              pipeline_mode=pl.Buffered(1))
    else:
        w_spec = pl.BlockSpec((2, c2, c_out), lambda i: (0, 0, 0))
        c_spec = pl.BlockSpec((2, c_out), lambda i: (0, 0))

    out = pl.pallas_call(
        functools.partial(_patch_merge_kernel, eps=eps),
        out_shape=jax.ShapeDtypeStruct((n_rows * Wo, c_out), x.dtype),
        grid_spec=pltpu.PrefetchScalarGridSpec(
            num_scalar_prefetch=0,
            grid=grid,
            in_specs=[
                pl.BlockSpec((th, 2, Wo, c2), lambda i: (i, 0, 0, 0)),
                w_spec,
                c_spec,
            ],
            out_specs=pl.BlockSpec((th * Wo, c_out), lambda i: (i, 0)),
        ),
        compiler_params=pltpu.CompilerParams(
            dimension_semantics=("parallel",),
            vmem_limit_bytes=int(vmem_limit_bytes),
        ),
    )(xr, w_stk, consts)

    return out.reshape(*lead, Ho, Wo, c_out)


def patch_merging_ref(x, gamma, beta, w_reduction, *, eps=1e-5):
    """Pure-JAX reference mirroring the PyTorch module."""
    *lead, H, W, C = x.shape
    x = jnp.pad(x, [(0, 0)] * len(lead) + [(0, H % 2), (0, W % 2), (0, 0)])
    x0 = x[..., 0::2, 0::2, :]
    x1 = x[..., 1::2, 0::2, :]
    x2 = x[..., 0::2, 1::2, :]
    x3 = x[..., 1::2, 1::2, :]
    xc = jnp.concatenate([x0, x1, x2, x3], axis=-1).astype(jnp.float32)
    mean = jnp.mean(xc, axis=-1, keepdims=True)
    var = jnp.mean((xc - mean) ** 2, axis=-1, keepdims=True)
    xn = (xc - mean) * jax.lax.rsqrt(var + eps) * gamma + beta
    y = jnp.einsum("...i,oi->...o", xn, w_reduction.astype(jnp.float32))
    return y.astype(x.dtype)


if __name__ == "__main__":
    key = jax.random.PRNGKey(0)
    k_x, k_w, k_g, k_b = jax.random.split(key, 4)

    B, H, W, dim = 2, 16, 16, 32               # x: [B, H, W, dim] channels-last
    x = jax.random.normal(k_x, (B, H, W, dim), dtype=jnp.float32)
    # nn.Linear(4*dim, 2*dim, bias=False) weight: (2*dim, 4*dim)
    w_reduction = jax.random.normal(k_w, (2 * dim, 4 * dim), jnp.float32) * 0.05
    # nn.LayerNorm(4*dim) params (perturbed for a stricter test)
    gamma = 1.0 + 0.1 * jax.random.normal(k_g, (4 * dim,), jnp.float32)
    beta = 0.1 * jax.random.normal(k_b, (4 * dim,), jnp.float32)

    pm = jax.jit(patch_merging)

    # f32, even spatial dims.
    out = jax.block_until_ready(pm(x, gamma, beta, w_reduction))
    ref = patch_merging_ref(x, gamma, beta, w_reduction)
    assert out.shape == (B, H // 2, W // 2, 2 * dim), out.shape
    assert jnp.allclose(out, ref, atol=1e-4, rtol=1e-4), float(
        jnp.max(jnp.abs(out - ref)))

    # Odd spatial dims exercise the F.pad branch.
    x_odd = x[:, :15, :15, :]
    out_odd = jax.block_until_ready(pm(x_odd, gamma, beta, w_reduction))
    ref_odd = patch_merging_ref(x_odd, gamma, beta, w_reduction)
    assert out_odd.shape == (B, 8, 8, 2 * dim), out_odd.shape
    assert jnp.allclose(out_odd, ref_odd, atol=1e-4, rtol=1e-4), float(
        jnp.max(jnp.abs(out_odd - ref_odd)))

    # bf16 activations + bf16 reduction weight (MXU path), loose tolerance.
    x_bf = x.astype(jnp.bfloat16)
    w_bf = w_reduction.astype(jnp.bfloat16)
    out_bf = jax.block_until_ready(pm(x_bf, gamma, beta, w_bf))
    ref_bf = patch_merging_ref(x_bf, gamma, beta, w_bf)
    assert out_bf.dtype == jnp.bfloat16 and out_bf.shape == ref_bf.shape
    assert jnp.allclose(out_bf.astype(jnp.float32), ref_bf.astype(jnp.float32),
                        atol=5e-2, rtol=5e-2), float(
        jnp.max(jnp.abs(out_bf.astype(jnp.float32) - ref_bf.astype(jnp.float32))))

    print("KERNEL_OK")
</pallas_src>

<mosaic_0001>
module attributes {stable_mosaic.version = 11 : i64} {
  func.func @_patch_merge_kernel(%arg0: i32, %arg1: memref<8x2x8x64xf32, #tpu.memory_space<vmem>>, %arg2: memref<2x64x64xf32, #tpu.memory_space<vmem>>, %arg3: memref<2x64xf32, #tpu.memory_space<vmem>>, %arg4: memref<64x64xf32, #tpu.memory_space<vmem>>) attributes {dimension_semantics = [#tpu.dimension_semantics<parallel>], iteration_bounds = array<i64: 2>, scalar_prefetch = 0 : i64, scratch_operands = 0 : i64, tpu.core_type = #tpu.core_type<tc>, window_params = [{transform_indices = @transform_0, window_bounds = array<i64: 8, 2, 8, 64>}, {pipeline_mode = #tpu.pipeline_mode<synchronous>, transform_indices = @transform_1, window_bounds = array<i64: 2, 64, 64>}, {pipeline_mode = #tpu.pipeline_mode<synchronous>, transform_indices = @transform_2, window_bounds = array<i64: 2, 64>}, {transform_indices = @transform_3, window_bounds = array<i64: 64, 64>}]} {
    %c0 = arith.constant 0 : index
    %c0_0 = arith.constant 0 : index
    %c0_1 = arith.constant 0 : index
    %c0_2 = arith.constant 0 : index
    %0 = vector.load %arg1[%c0, %c0_0, %c0_1, %c0_2] : memref<8x2x8x64xf32, #tpu.memory_space<vmem>>, vector<8x1x8x64xf32>
    %1 = vector.shape_cast %0 : vector<8x1x8x64xf32> to vector<8x8x64xf32>
    %2 = vector.shape_cast %1 : vector<8x8x64xf32> to vector<64x64xf32>
    %c0_3 = arith.constant 0 : index
    %c1 = arith.constant 1 : index
    %c0_4 = arith.constant 0 : index
    %c0_5 = arith.constant 0 : index
    %3 = vector.load %arg1[%c0_3, %c1, %c0_4, %c0_5] : memref<8x2x8x64xf32, #tpu.memory_space<vmem>>, vector<8x1x8x64xf32>
    %4 = vector.shape_cast %3 : vector<8x1x8x64xf32> to vector<8x8x64xf32>
    %5 = vector.shape_cast %4 : vector<8x8x64xf32> to vector<64x64xf32>
    %cst = arith.constant dense<0.000000e+00> : vector<64xf32>
    %6 = vector.multi_reduction <add>, %2, %cst [1] : vector<64x64xf32> to vector<64xf32>
    %7 = vector.shape_cast %6 : vector<64xf32> to vector<64x1xf32>
    %cst_6 = arith.constant dense<0.000000e+00> : vector<64xf32>
    %8 = vector.multi_reduction <add>, %5, %cst_6 [1] : vector<64x64xf32> to vector<64xf32>
    %9 = vector.shape_cast %8 : vector<64xf32> to vector<64x1xf32>
    %10 = arith.addf %7, %9 : vector<64x1xf32>
    %11 = arith.mulf %2, %2 : vector<64x64xf32>
    %cst_7 = arith.constant dense<0.000000e+00> : vector<64xf32>
    %12 = vector.multi_reduction <add>, %11, %cst_7 [1] : vector<64x64xf32> to vector<64xf32>
    %13 = vector.shape_cast %12 : vector<64xf32> to vector<64x1xf32>
    %14 = arith.mulf %5, %5 : vector<64x64xf32>
    %cst_8 = arith.constant dense<0.000000e+00> : vector<64xf32>
    %15 = vector.multi_reduction <add>, %14, %cst_8 [1] : vector<64x64xf32> to vector<64xf32>
    %16 = vector.shape_cast %15 : vector<64xf32> to vector<64x1xf32>
    %17 = arith.addf %13, %16 : vector<64x1xf32>
    %cst_9 = arith.constant 7.812500e-03 : f32
    %18 = vector.broadcast %cst_9 : f32 to vector<64x1xf32>
    %19 = arith.mulf %10, %18 : vector<64x1xf32>
    %cst_10 = arith.constant 7.812500e-03 : f32
    %20 = vector.broadcast %cst_10 : f32 to vector<64x1xf32>
    %21 = arith.mulf %17, %20 : vector<64x1xf32>
    %22 = arith.mulf %19, %19 : vector<64x1xf32>
    %23 = arith.subf %21, %22 : vector<64x1xf32>
    %cst_11 = arith.constant 9.99999974E-6 : f32
    %24 = vector.broadcast %cst_11 : f32 to vector<64x1xf32>
    %25 = arith.addf %23, %24 : vector<64x1xf32>
    %26 = math.rsqrt %25 : vector<64x1xf32>
    %c0_12 = arith.constant 0 : index
    %c0_13 = arith.constant 0 : index
    %c0_14 = arith.constant 0 : index
    %27 = vector.load %arg2[%c0_12, %c0_13, %c0_14] : memref<2x64x64xf32, #tpu.memory_space<vmem>>, vector<1x64x64xf32>
    %28 = vector.shape_cast %27 : vector<1x64x64xf32> to vector<64x64xf32>
    %cst_15 = arith.constant dense<0.000000e+00> : vector<64x64xf32>
    %29 = tpu.matmul %2, %28, %cst_15 {dimension_numbers = #tpu.dot_dimension_numbers<[1], [0], [0], [1], [0, 0, 1, 1], [], []>} : vector<64x64xf32>, vector<64x64xf32>, vector<64x64xf32> -> vector<64x64xf32>
    %c1_16 = arith.constant 1 : index
    %c0_17 = arith.constant 0 : index
    %c0_18 = arith.constant 0 : index
    %30 = vector.load %arg2[%c1_16, %c0_17, %c0_18] : memref<2x64x64xf32, #tpu.memory_space<vmem>>, vector<1x64x64xf32>
    %31 = vector.shape_cast %30 : vector<1x64x64xf32> to vector<64x64xf32>
    %cst_19 = arith.constant dense<0.000000e+00> : vector<64x64xf32>
    %32 = tpu.matmul %5, %31, %cst_19 {dimension_numbers = #tpu.dot_dimension_numbers<[1], [0], [0], [1], [0, 0, 1, 1], [], []>} : vector<64x64xf32>, vector<64x64xf32>, vector<64x64xf32> -> vector<64x64xf32>
    %33 = arith.addf %29, %32 : vector<64x64xf32>
    %c0_20 = arith.constant 0 : index
    %c0_21 = arith.constant 0 : index
    %34 = vector.load %arg3[%c0_20, %c0_21] : memref<2x64xf32, #tpu.memory_space<vmem>>, vector<1x64xf32>
    %c1_22 = arith.constant 1 : index
    %c0_23 = arith.constant 0 : index
    %35 = vector.load %arg3[%c1_22, %c0_23] : memref<2x64xf32, #tpu.memory_space<vmem>>, vector<1x64xf32>
    %36 = vector.broadcast %19 : vector<64x1xf32> to vector<64x64xf32>
    %37 = vector.broadcast %34 : vector<1x64xf32> to vector<64x64xf32>
    %38 = arith.mulf %36, %37 : vector<64x64xf32>
    %39 = arith.subf %33, %38 : vector<64x64xf32>
    %40 = vector.broadcast %26 : vector<64x1xf32> to vector<64x64xf32>
    %41 = arith.mulf %39, %40 : vector<64x64xf32>
    %42 = vector.broadcast %35 : vector<1x64xf32> to vector<64x64xf32>
    %43 = arith.addf %41, %42 : vector<64x64xf32>
    %c0_24 = arith.constant 0 : index
    %c0_25 = arith.constant 0 : index
    %44 = vector.load %arg4[%c0_24, %c0_25] : memref<64x64xf32, #tpu.memory_space<vmem>>, vector<64x64xf32>
    tpu.vector_store %arg4[%c0_24, %c0_25], %43 {strides = array<i32>} : memref<64x64xf32, #tpu.memory_space<vmem>>, vector<64x64xf32>,
    return
  }
  func.func @transform_0(%arg0: i32) -> (i32, i32, i32, i32) {
    %c0_i32 = arith.constant 0 : i32
    %c0_i32_0 = arith.constant 0 : i32
    %c0_i32_1 = arith.constant 0 : i32
    %c0_i32_2 = arith.constant 0 : i32
    return %arg0, %c0_i32, %c0_i32_0, %c0_i32_1 : i32, i32, i32, i32
  }
  func.func @transform_1(%arg0: i32) -> (i32, i32, i32) {
    %c0_i32 = arith.constant 0 : i32
    %c0_i32_0 = arith.constant 0 : i32
    %c0_i32_1 = arith.constant 0 : i32
    %c0_i32_2 = arith.constant 0 : i32
    return %c0_i32, %c0_i32_0, %c0_i32_1 : i32, i32, i32
  }
  func.func @transform_2(%arg0: i32) -> (i32, i32) {
    %c0_i32 = arith.constant 0 : i32
    %c0_i32_0 = arith.constant 0 : i32
    %c0_i32_1 = arith.constant 0 : i32
    return %c0_i32, %c0_i32_0 : i32, i32
  }
  func.func @transform_3(%arg0: i32) -> (i32, i32) {
    %c0_i32 = arith.constant 0 : i32
    %c0_i32_0 = arith.constant 0 : i32
    return %arg0, %c0_i32 : i32, i32
  }
}

</mosaic_0001>

<llo_original>
// kernel: patch_merging.1
$region0: #{patch_merging.1}
  #allocation0 [shape = 'u32[]', space=smem, size = 0x4, offset = 0x4, fixed_abs, tag = 'smem constant byte address 0x4 - core index']
  #allocation1 [shape = 'u32[144,128]{1,0:T(1,128)}', space=vmem, size = 0x12000, scoped, tag = 'internal scratch']
  %s0 = inlined_call_operand.vmem [shape: f32[16,2,8,64], index: 0, kind: input, shape index: {}]
  %s1 = inlined_call_operand.vmem [shape: f32[2,64,64], index: 1, kind: input, shape index: {}]
  %s2 = inlined_call_operand.vmem [shape: f32[2,64], index: 2, kind: input, shape index: {}]
  %s3 = inlined_call_operand.hbm [shape: f32[128,64], index: 3, kind: output, shape index: {}]
  %s4 = sld [smem:[#allocation0]]
  $region45: #{patch_merging.1} parent=0
    _
  %s6 = ssub.s32 1, %s4
  %s7 = scalar_select 0, %s6, %s4
  $region1: #{patch_merging.1} parent=0
    #allocation2 [shape = 'u8[65536]{0}', space=vmem, size = 0x10000, scoped, tag = 'output window, operand 0']
    #allocation3 [shape = 's32[2]{0}', space=sflag, size = 0x8, scoped, tag = 'scoped memory for patch_merging.1']
    %8 = vsyncpa [#allocation3], 0
    %s9 = scalar_lea.sflag [#allocation3], 1
    %10 = vsyncpa %s9, 0
    loop: start=0, step=1, limit=4
    $region2: #{patch_merging.1} parent=1 // loop_pre_header
      _
    $region3: #{patch_merging.1} parent=1 // loop_header
      %s12 = sphi 0, %s16
      %p13 = scmp.ge.s32.totalorder %s12, 4
      %s22 = sphi 0, %s24
      %s25 = sphi 0, %s22
      %s26 = sphi 0, %s25
      %s42 = sphi 0, %s26
      %s46 = sphi 0, %s46
      %s48 = sphi 0, %s46
      %s49 = sphi 0, %s48
      %s63 = sphi 0, %s49
      %s67 = sphi 0, %s67
      %s69 = sphi 0, %s67
      %s70 = sphi 0, %s69
      %s84 = sphi 0, %s70
      %s90 = sphi 0, %s92
      %s93 = sphi 0, %s90
      %s94 = sphi 0, %s93
      %s110 = sphi 0, %s94
    $region4: #{patch_merging.1} parent=1 // loop_header_branch
      %15 = sbr.rel (%p13) target = $region8
    $region5: #{patch_merging.1} parent=1 // loop_body
      %s17 = ssub.s32 %s12, 1
      %s18 = ssub.s32 %s12, 2
      %s19 = sadd.s32 %s12, 1
      %s20 = ssub.s32 %s12, %s19
      %p21 = scmp.eq.s32.totalorder %s20, 0
      %s23 = sadd.s32 %s22, 1
      %s24 = scalar_select %p21, %s22, %s23
      %p27 = pneg %p21
      %p28 = scmp.eq.s32.totalorder %s12, 1
      %p29 = por %p27, %p28
      %p30 = scmp.ne.s32.totalorder %s22, %s25
      %p31 = scmp.eq.s32.totalorder %s12, 0
      %p32 = por %p30, %p31
      %p33 = scmp.ne.s32.totalorder %s22, %s25
      %p34 = scmp.eq.s32.totalorder %s17, 1
      %p35 = por %p33, %p34
      %p36 = scmp.ne.s32.totalorder %s25, %s26
      %p37 = scmp.eq.s32.totalorder %s17, 0
      %p38 = por %p36, %p37
      %p39 = scmp.ne.s32.totalorder %s25, %s26
      %p40 = scmp.eq.s32.totalorder %s18, 1
      %p41 = por %p39, %p40
      %p43 = scmp.ne.s32.totalorder %s26, %s42
      %p44 = scmp.eq.s32.totalorder %s18, 0
      %p45 = por %p43, %p44
      %s47 = sadd.s32 %s46, 1
      %p50 = scmp.eq.s32.totalorder %s12, 1
      %p51 = scmp.ne.s32.totalorder %s46, %s48
      %p52 = scmp.eq.s32.totalorder %s12, 0
      %p53 = por %p51, %p52
      %p54 = scmp.ne.s32.totalorder %s46, %s48
      %p55 = scmp.eq.s32.totalorder %s17, 1
      %p56 = por %p54, %p55
      %p57 = scmp.ne.s32.totalorder %s48, %s49
      %p58 = scmp.eq.s32.totalorder %s17, 0
      %p59 = por %p57, %p58
      %p60 = scmp.ne.s32.totalorder %s48, %s49
      %p61 = scmp.eq.s32.totalorder %s18, 1
      %p62 = por %p60, %p61
      %p64 = scmp.ne.s32.totalorder %s49, %s63
      %p65 = scmp.eq.s32.totalorder %s18, 0
      %p66 = por %p64, %p65
      %s68 = sadd.s32 %s67, 1
      %p71 = scmp.eq.s32.totalorder %s12, 1
      %p72 = scmp.ne.s32.totalorder %s67, %s69
      %p73 = scmp.eq.s32.totalorder %s12, 0
      %p74 = por %p72, %p73
      %p75 = scmp.ne.s32.totalorder %s67, %s69
      %p76 = scmp.eq.s32.totalorder %s17, 1
      %p77 = por %p75, %p76
      %p78 = scmp.ne.s32.totalorder %s69, %s70
      %p79 = scmp.eq.s32.totalorder %s17, 0
      %p80 = por %p78, %p79
      %p81 = scmp.ne.s32.totalorder %s69, %s70
      %p82 = scmp.eq.s32.totalorder %s18, 1
      %p83 = por %p81, %p82
      %p85 = scmp.ne.s32.totalorder %s70, %s84
      %p86 = scmp.eq.s32.totalorder %s18, 0
      %p87 = por %p85, %p86
      %s88 = ssub.s32 %s12, %s19
      %p89 = scmp.eq.s32.totalorder %s88, 0
      %s91 = sadd.s32 %s90, 1
      %s92 = scalar_select %p89, %s90, %s91
      %p95 = pneg %p89
      %p96 = scmp.eq.s32.totalorder %s12, 1
      %p97 = por %p95, %p96
      %p98 = scmp.ne.s32.totalorder %s90, %s93
      %p99 = scmp.eq.s32.totalorder %s12, 0
      %p100 = por %p98, %p99
      %p101 = scmp.ne.s32.totalorder %s90, %s93
      %p102 = scmp.eq.s32.totalorder %s17, 1
      %p103 = por %p101, %p102
      %p104 = scmp.ne.s32.totalorder %s93, %s94
      %p105 = scmp.eq.s32.totalorder %s17, 0
      %p106 = por %p104, %p105
      %p107 = scmp.ne.s32.totalorder %s93, %s94
      %p108 = scmp.eq.s32.totalorder %s18, 1
      %p109 = por %p107, %p108
      %p111 = scmp.ne.s32.totalorder %s94, %s110
      %p112 = scmp.eq.s32.totalorder %s18, 0
      %p113 = por %p111, %p112
      %p114 = scmp.le.s32.totalorder 1, %s12
      %p115 = scmp.lt.s32.totalorder %s12, 3
      %p116 = pnand %p114, %p115
      %p117 = pneg %p116
      // Predicated region
      $region9: #{patch_merging.1} parent=5 // pred_check
        _
      $region10: #{patch_merging.1} parent=5 // pred_check_branch
        %119 = sbr.rel (%p116) target = $region12
      $region11: #{patch_merging.1} parent=5 // pred_region
        %s120 = ssub.s32 %s12, 1
        // Predicated region
        $region13: #{patch_merging.1} parent=11 // pred_check
          %p121 = pneg %p59
        $region14: #{patch_merging.1} parent=11 // pred_check_branch
          %123 = sbr.rel (%p121) target = $region16
        $region15: #{patch_merging.1} parent=11 // pred_region
          _
        $region16: #{patch_merging.1} parent=11 // pred_fallthru
          _
        // Predicated region
        $region17: #{patch_merging.1} parent=11 // pred_check
          %p124 = pneg %p80
        $region18: #{patch_merging.1} parent=11 // pred_check_branch
          %126 = sbr.rel (%p124) target = $region20
        $region19: #{patch_merging.1} parent=11 // pred_region
          _
        $region20: #{patch_merging.1} parent=11 // pred_fallthru
          _
      $region12: #{patch_merging.1} parent=5 // pred_fallthru
        _
      %p127 = scmp.lt.s32.totalorder %s12, 2
      // Predicated region
      $region21: #{patch_merging.1} parent=5 // pred_check
        %p128 = pneg %p127
      $region22: #{patch_merging.1} parent=5 // pred_check_branch
        %130 = sbr.rel (%p128) target = $region24
      $region23: #{patch_merging.1} parent=5 // pred_region
        // Predicated region
        $region25: #{patch_merging.1} parent=23 // pred_check
          %p131 = pneg %p32
        $region26: #{patch_merging.1} parent=23 // pred_check_branch
          %133 = sbr.rel (%p131) target = $region28
        $region27: #{patch_merging.1} parent=23 // pred_region
          %s134 = smul.u32 8, %s12
          %p135 = scmp.lt.s32.totalorder %s134, 15
          %s136 = scalar_select %p135, %s134, 15
          %s137 = smul.addr %s136, 2
          %s138 = smul.addr %s137, 8
          %s139 = scalar_lea.vmem %s0, %s138
          %s140 = smul.u32 8, %s12
        $region28: #{patch_merging.1} parent=23 // pred_fallthru
          _
      $region24: #{patch_merging.1} parent=5 // pred_fallthru
        _
      %p141 = scmp.le.s32.totalorder 1, %s12
      %p142 = scmp.lt.s32.totalorder %s12, 3
      %p143 = pnand %p141, %p142
      %p144 = pneg %p143
      // Predicated region
      $region29: #{patch_merging.1} parent=5 // pred_check
        _
      $region30: #{patch_merging.1} parent=5 // pred_check_branch
        %146 = sbr.rel (%p143) target = $region32
      $region31: #{patch_merging.1} parent=5 // pred_region
        %s147 = ssub.s32 %s12, 1
        %s148 = smul.u32 8, %s17
        %p149 = scmp.lt.s32.totalorder %s148, 15
        %s150 = scalar_select %p149, %s148, 15
        %s151 = smul.addr %s150, 2
        %s152 = smul.addr %s151, 8
        %s153 = scalar_lea.vmem %s0, %s152
        %p154 = pneg %p38
        %p155 = pneg %p35
        %p156 = pneg %p59
        %p157 = pneg %p56
        %p158 = pneg %p80
        %p159 = pneg %p77
        %p160 = pneg %p106
        %p161 = pneg %p103
        %s162 = sand.u32 %s93, 1
        %s163 = scalar_lea.sflag [#allocation3], %s162
        %s164 = sand.u32 %s93, 1
        %s165 = smul.addr %s164, 64
        %s166 = scalar_lea.vmem [#allocation2], %s165
        %s167 = smul.u32 8, %s17
        %p168 = scmp.lt.s32.totalorder %s167, 15
        %s169 = scalar_select %p168, %s167, 15
        %s170 = smul.addr %s169, 2
        %s171 = smul.addr %s170, 8
        %s172 = scalar_lea.vmem %s0, %s171
        %s173 = smul.u32 8, %s17
        %s174 = smul.u32 8, %s17
        %v175 = vld [vmem:[%s172] sm:$0xff]
        %v176 = vld [vmem:[%s172 + $0x10] sm:$0xff]
        %v177 = vld [vmem:[%s172 + $0x20] sm:$0xff]
        %v178 = vld [vmem:[%s172 + $0x30] sm:$0xff]
        %v179 = vld [vmem:[%s172 + $0x40] sm:$0xff]
        %v180 = vld [vmem:[%s172 + $0x50] sm:$0xff]
        %v181 = vld [vmem:[%s172 + $0x60] sm:$0xff]
        %v182 = vld [vmem:[%s172 + $0x70] sm:$0xff]
        %s183 = scalar_lea.vmem %s172, 8
        %v184 = vld [vmem:[%s183] sm:$0xff]
        %v185 = vld [vmem:[%s183 + $0x10] sm:$0xff]
        %v186 = vld [vmem:[%s183 + $0x20] sm:$0xff]
        %v187 = vld [vmem:[%s183 + $0x30] sm:$0xff]
        %v188 = vld [vmem:[%s183 + $0x40] sm:$0xff]
        %v189 = vld [vmem:[%s183 + $0x50] sm:$0xff]
        %v190 = vld [vmem:[%s183 + $0x60] sm:$0xff]
        %v191 = vld [vmem:[%s183 + $0x70] sm:$0xff]
        %vm192 = vcmask 523264
        %v193 = vsel %vm192, %v175, 0.0
        %194 = vadd.xlane.f32.xlu0 %v193
        %v195 = vpop.xlane.xlu0 %194
        %v196 = vsel %vm192, %v176, 0.0
        %197 = vadd.xlane.f32.xlu0 %v196
        %v198 = vpop.xlane.xlu0 %197
        %v199 = vsel %vm192, %v177, 0.0
        %200 = vadd.xlane.f32.xlu0 %v199
        %v201 = vpop.xlane.xlu0 %200
        %v202 = vsel %vm192, %v178, 0.0
        %203 = vadd.xlane.f32.xlu0 %v202
        %v204 = vpop.xlane.xlu0 %203
        %v205 = vsel %vm192, %v179, 0.0
        %206 = vadd.xlane.f32.xlu0 %v205
        %v207 = vpop.xlane.xlu0 %206
        %v208 = vsel %vm192, %v180, 0.0
        %209 = vadd.xlane.f32.xlu0 %v208
        %v210 = vpop.xlane.xlu0 %209
        %v211 = vsel %vm192, %v181, 0.0
        %212 = vadd.xlane.f32.xlu0 %v211
        %v213 = vpop.xlane.xlu0 %212
        %v214 = vsel %vm192, %v182, 0.0
        %215 = vadd.xlane.f32.xlu0 %v214
        %v216 = vpop.xlane.xlu0 %215
        %v217 = vsel %vm192, %v184, 0.0
        %218 = vadd.xlane.f32.xlu0 %v217
        %v219 = vpop.xlane.xlu0 %218
        %v220 = vsel %vm192, %v185, 0.0
        %221 = vadd.xlane.f32.xlu0 %v220
        %v222 = vpop.xlane.xlu0 %221
        %v223 = vsel %vm192, %v186, 0.0
        %224 = vadd.xlane.f32.xlu0 %v223
        %v225 = vpop.xlane.xlu0 %224
        %v226 = vsel %vm192, %v187, 0.0
        %227 = vadd.xlane.f32.xlu0 %v226
        %v228 = vpop.xlane.xlu0 %227
        %v229 = vsel %vm192, %v188, 0.0
        %230 = vadd.xlane.f32.xlu0 %v229
        %v231 = vpop.xlane.xlu0 %230
        %v232 = vsel %vm192, %v189, 0.0
        %233 = vadd.xlane.f32.xlu0 %v232
        %v234 = vpop.xlane.xlu0 %233
        %v235 = vsel %vm192, %v190, 0.0
        %236 = vadd.xlane.f32.xlu0 %v235
        %v237 = vpop.xlane.xlu0 %236
        %v238 = vsel %vm192, %v191, 0.0
        %239 = vadd.xlane.f32.xlu0 %v238
        %v240 = vpop.xlane.xlu0 %239
        %v241 = vadd.f32 %v195, %v219
        %v242 = vadd.f32 %v198, %v222
        %v243 = vadd.f32 %v201, %v225
        %v244 = vadd.f32 %v204, %v228
        %v245 = vadd.f32 %v207, %v231
        %v246 = vadd.f32 %v210, %v234
        %v247 = vadd.f32 %v213, %v237
        %v248 = vadd.f32 %v216, %v240
        %v249 = vmul.f32 %v175, %v175
        %v250 = vmul.f32 %v176, %v176
        %v251 = vmul.f32 %v177, %v177
        %v252 = vmul.f32 %v178, %v178
        %v253 = vmul.f32 %v179, %v179
        %v254 = vmul.f32 %v180, %v180
        %v255 = vmul.f32 %v181, %v181
        %v256 = vmul.f32 %v182, %v182
        %v257 = vsel %vm192, %v249, 0.0
        %258 = vadd.xlane.f32.xlu0 %v257
        %v259 = vpop.xlane.xlu0 %258
        %v260 = vsel %vm192, %v250, 0.0
        %261 = vadd.xlane.f32.xlu0 %v260
        %v262 = vpop.xlane.xlu0 %261
        %v263 = vsel %vm192, %v251, 0.0
        %264 = vadd.xlane.f32.xlu0 %v263
        %v265 = vpop.xlane.xlu0 %264
        %v266 = vsel %vm192, %v252, 0.0
        %267 = vadd.xlane.f32.xlu0 %v266
        %v268 = vpop.xlane.xlu0 %267
        %v269 = vsel %vm192, %v253, 0.0
        %270 = vadd.xlane.f32.xlu0 %v269
        %v271 = vpop.xlane.xlu0 %270
        %v272 = vsel %vm192, %v254, 0.0
        %273 = vadd.xlane.f32.xlu0 %v272
        %v274 = vpop.xlane.xlu0 %273
        %v275 = vsel %vm192, %v255, 0.0
        %276 = vadd.xlane.f32.xlu0 %v275
        %v277 = vpop.xlane.xlu0 %276
        %v278 = vsel %vm192, %v256, 0.0
        %279 = vadd.xlane.f32.xlu0 %v278
        %v280 = vpop.xlane.xlu0 %279
        %v281 = vmul.f32 %v184, %v184
        %v282 = vmul.f32 %v185, %v185
        %v283 = vmul.f32 %v186, %v186
        %v284 = vmul.f32 %v187, %v187
        %v285 = vmul.f32 %v188, %v188
        %v286 = vmul.f32 %v189, %v189
        %v287 = vmul.f32 %v190, %v190
        %v288 = vmul.f32 %v191, %v191
        %v289 = vsel %vm192, %v281, 0.0
        %290 = vadd.xlane.f32.xlu0 %v289
        %v291 = vpop.xlane.xlu0 %290
        %v292 = vsel %vm192, %v282, 0.0
        %293 = vadd.xlane.f32.xlu0 %v292
        %v294 = vpop.xlane.xlu0 %293
        %v295 = vsel %vm192, %v283, 0.0
        %296 = vadd.xlane.f32.xlu0 %v295
        %v297 = vpop.xlane.xlu0 %296
        %v298 = vsel %vm192, %v284, 0.0
        %299 = vadd.xlane.f32.xlu0 %v298
        %v300 = vpop.xlane.xlu0 %299
        %v301 = vsel %vm192, %v285, 0.0
        %302 = vadd.xlane.f32.xlu0 %v301
        %v303 = vpop.xlane.xlu0 %302
        %v304 = vsel %vm192, %v286, 0.0
        %305 = vadd.xlane.f32.xlu0 %v304
        %v306 = vpop.xlane.xlu0 %305
        %v307 = vsel %vm192, %v287, 0.0
        %308 = vadd.xlane.f32.xlu0 %v307
        %v309 = vpop.xlane.xlu0 %308
        %v310 = vsel %vm192, %v288, 0.0
        %311 = vadd.xlane.f32.xlu0 %v310
        %v312 = vpop.xlane.xlu0 %311
        %v313 = vadd.f32 %v259, %v291
        %v314 = vadd.f32 %v262, %v294
        %v315 = vadd.f32 %v265, %v297
        %v316 = vadd.f32 %v268, %v300
        %v317 = vadd.f32 %v271, %v303
        %v318 = vadd.f32 %v274, %v306
        %v319 = vadd.f32 %v277, %v309
        %v320 = vadd.f32 %v280, %v312
        %v321 = vmul.f32 %v241, 0.0078125
        %v322 = vmul.f32 %v242, 0.0078125
        %v323 = vmul.f32 %v243, 0.0078125
        %v324 = vmul.f32 %v244, 0.0078125
        %v325 = vmul.f32 %v245, 0.0078125
        %v326 = vmul.f32 %v246, 0.0078125
        %v327 = vmul.f32 %v247, 0.0078125
        %v328 = vmul.f32 %v248, 0.0078125
        %v329 = vmul.f32 %v313, 0.0078125
        %v330 = vmul.f32 %v314, 0.0078125
        %v331 = vmul.f32 %v315, 0.0078125
        %v332 = vmul.f32 %v316, 0.0078125
        %v333 = vmul.f32 %v317, 0.0078125
        %v334 = vmul.f32 %v318, 0.0078125
        %v335 = vmul.f32 %v319, 0.0078125
        %v336 = vmul.f32 %v320, 0.0078125
        %v337 = vmul.f32 %v321, %v321
        %v338 = vmul.f32 %v322, %v322
        %v339 = vmul.f32 %v323, %v323
        %v340 = vmul.f32 %v324, %v324
        %v341 = vmul.f32 %v325, %v325
        %v342 = vmul.f32 %v326, %v326
        %v343 = vmul.f32 %v327, %v327
        %v344 = vmul.f32 %v328, %v328
        %v345 = vsub.f32 %v329, %v337
        %v346 = vsub.f32 %v330, %v338
        %v347 = vsub.f32 %v331, %v339
        %v348 = vsub.f32 %v332, %v340
        %v349 = vsub.f32 %v333, %v341
        %v350 = vsub.f32 %v334, %v342
        %v351 = vsub.f32 %v335, %v343
        %v352 = vsub.f32 %v336, %v344
        %v353 = vadd.f32 %v345, 1e-05
        %v354 = vadd.f32 %v346, 1e-05
        %v355 = vadd.f32 %v347, 1e-05
        %v356 = vadd.f32 %v348, 1e-05
        %v357 = vadd.f32 %v349, 1e-05
        %v358 = vadd.f32 %v350, 1e-05
        %v359 = vadd.f32 %v351, 1e-05
        %v360 = vadd.f32 %v352, 1e-05
        %v361 = vrsqrt.pop %v353
        %v362 = vrsqrt.pop %v354
        %v363 = vrsqrt.pop %v355
        %v364 = vrsqrt.pop %v356
        %v365 = vrsqrt.pop %v357
        %v366 = vrsqrt.pop %v358
        %v367 = vrsqrt.pop %v359
        %v368 = vrsqrt.pop %v360
        %v369 = vld [vmem:[%s1] sm:$0xff]
        %v370 = vld [vmem:[%s1 + $0x8] sm:$0xff]
        %v371 = vld [vmem:[%s1 + $0x10] sm:$0xff]
        %v372 = vld [vmem:[%s1 + $0x18] sm:$0xff]
        %v373 = vld [vmem:[%s1 + $0x20] sm:$0xff]
        %v374 = vld [vmem:[%s1 + $0x28] sm:$0xff]
        %v375 = vld [vmem:[%s1 + $0x30] sm:$0xff]
        %v376 = vld [vmem:[%s1 + $0x38] sm:$0xff]
        %s377 = scalar_lea.vmem %s1, 64
        %v378 = vld [vmem:[%s377] sm:$0xff]
        %v379 = vld [vmem:[%s377 + $0x8] sm:$0xff]
        %v380 = vld [vmem:[%s377 + $0x10] sm:$0xff]
        %v381 = vld [vmem:[%s377 + $0x18] sm:$0xff]
        %v382 = vld [vmem:[%s377 + $0x20] sm:$0xff]
        %v383 = vld [vmem:[%s377 + $0x28] sm:$0xff]
        %v384 = vld [vmem:[%s377 + $0x30] sm:$0xff]
        %v385 = vld [vmem:[%s377 + $0x38] sm:$0xff]
        %v387 = vsel %vm192, %v184, 0
        %v390 = vsel %vm192, %v185, 0
        %v393 = vsel %vm192, %v186, 0
        %v396 = vsel %vm192, %v187, 0
        %v399 = vsel %vm192, %v188, 0
        %v402 = vsel %vm192, %v189, 0
        %v405 = vsel %vm192, %v190, 0
        %v408 = vsel %vm192, %v191, 0
        %410 = vmatprep.subr.mxu0 0.0
        %411 = vmatpush1.msra.mxu0 0.0
        %412 = vmatprep.subr.mxu0 0.0
        %413 = vmatpush1.msra.mxu0 0.0
        %414 = vmatprep.subr.mxu0 0.0
        %415 = vmatpush1.msra.mxu0 0.0
        %416 = vmatprep.subr.mxu0 0.0
        %417 = vmatpush1.msra.mxu0 0.0
        %418 = vmatprep.subr.mxu0 0.0
        %419 = vmatpush1.msra.mxu0 0.0
        %420 = vmatprep.subr.mxu0 0.0
        %421 = vmatpush1.msra.mxu0 0.0
        %422 = vmatprep.subr.mxu0 0.0
        %423 = vmatpush1.msra.mxu0 0.0
        %424 = vmatprep.subr.mxu0 0.0
        %425 = vmatpush1.msra.mxu0 0.0
        %426 = vmatprep.subr.mxu0 0.0
        %427 = vmatpush1.msra.mxu0 %v385
        %428 = vmatprep.subr.mxu0 0.0
        %429 = vmatpush1.msra.mxu0 %v384
        %430 = vmatprep.subr.mxu0 0.0
        %431 = vmatpush1.msra.mxu0 %v383
        %432 = vmatprep.subr.mxu0 0.0
        %433 = vmatpush1.msra.mxu0 %v382
        %434 = vmatprep.subr.mxu0 0.0
        %435 = vmatpush1.msra.mxu0 %v381
        %436 = vmatprep.subr.mxu0 0.0
        %437 = vmatpush1.msra.mxu0 %v380
        %438 = vmatprep.subr.mxu0 0.0
        %439 = vmatpush1.msra.mxu0 %v379
        %440 = vmatprep.subr.mxu0 0.0
        %441 = vmatpush1.msra.mxu0 %v378
        %442 = vmatprep.subr.mxu0 0.0
        %443 = vmatpush2.msra.mxu0 0.0
        %444 = vmatprep.subr.mxu0 0.0
        %445 = vmatpush2.msra.mxu0 0.0
        %446 = vmatprep.subr.mxu0 0.0
        %447 = vmatpush2.msra.mxu0 0.0
        %448 = vmatprep.subr.mxu0 0.0
        %449 = vmatpush2.msra.mxu0 0.0
        %450 = vmatprep.subr.mxu0 0.0
        %451 = vmatpush2.msra.mxu0 0.0
        %452 = vmatprep.subr.mxu0 0.0
        %453 = vmatpush2.msra.mxu0 0.0
        %454 = vmatprep.subr.mxu0 0.0
        %455 = vmatpush2.msra.mxu0 0.0
        %456 = vmatprep.subr.mxu0 0.0
        %457 = vmatpush2.msra.mxu0 0.0
        %458 = vmatprep.subr.mxu0 0.0
        %459 = vmatpush2.msra.mxu0 0.0
        %460 = vmatprep.subr.mxu0 0.0
        %461 = vmatpush2.msra.mxu0 0.0
        %462 = vmatprep.subr.mxu0 0.0
        %463 = vmatpush2.msra.mxu0 0.0
        %464 = vmatprep.subr.mxu0 0.0
        %465 = vmatpush2.msra.mxu0 0.0
        %466 = vmatprep.subr.mxu0 0.0
        %467 = vmatpush2.msra.mxu0 0.0
        %468 = vmatprep.subr.mxu0 0.0
        %469 = vmatpush2.msra.mxu0 0.0
        %470 = vmatprep.subr.mxu0 0.0
        %471 = vmatpush2.msra.mxu0 0.0
        %472 = vmatprep.subr.mxu0 0.0
        %473 = vmatpush2.msra.mxu0 0.0
        %474 = vmatprep.mubr.f32.mxu0 0.0
        %475 = vmatmul.mubr.f32.gmra.mxu0 %v387
        %v476 = vpop.f32.mrf.mxu0
        %v477 = vadd.f32 0.0, %v476
        %v478 = vpop.f32.mrf.mxu0
        %479 = vmatprep.mubr.f32.mxu0 0.0
        %480 = vmatmul.mubr.f32.gmra.mxu0 %v390
        %v481 = vpop.f32.mrf.mxu0
        %v482 = vadd.f32 0.0, %v481
        %v483 = vpop.f32.mrf.mxu0
        %484 = vmatprep.mubr.f32.mxu0 0.0
        %485 = vmatmul.mubr.f32.gmra.mxu0 %v393
        %v486 = vpop.f32.mrf.mxu0
        %v487 = vadd.f32 0.0, %v486
        %v488 = vpop.f32.mrf.mxu0
        %489 = vmatprep.mubr.f32.mxu0 0.0
        %490 = vmatmul.mubr.f32.gmra.mxu0 %v396
        %v491 = vpop.f32.mrf.mxu0
        %v492 = vadd.f32 0.0, %v491
        %v493 = vpop.f32.mrf.mxu0
        %494 = vmatprep.mubr.f32.mxu0 0.0
        %495 = vmatmul.mubr.f32.gmra.mxu0 %v399
        %v496 = vpop.f32.mrf.mxu0
        %v497 = vadd.f32 0.0, %v496
        %v498 = vpop.f32.mrf.mxu0
        %499 = vmatprep.mubr.f32.mxu0 0.0
        %500 = vmatmul.mubr.f32.gmra.mxu0 %v402
        %v501 = vpop.f32.mrf.mxu0
        %v502 = vadd.f32 0.0, %v501
        %v503 = vpop.f32.mrf.mxu0
        %504 = vmatprep.mubr.f32.mxu0 0.0
        %505 = vmatmul.mubr.f32.gmra.mxu0 %v405
        %v506 = vpop.f32.mrf.mxu0
        %v507 = vadd.f32 0.0, %v506
        %v508 = vpop.f32.mrf.mxu0
        %509 = vmatprep.mubr.f32.mxu0 0.0
        %510 = vmatmul.mubr.f32.gmra.mxu0 %v408
        %v511 = vpop.f32.mrf.mxu0
        %v512 = vadd.f32 0.0, %v511
        %v513 = vpop.f32.mrf.mxu0
        %514 = vdwg.mxu0
        %v516 = vsel %vm192, %v175, 0
        %v519 = vsel %vm192, %v176, 0
        %v522 = vsel %vm192, %v177, 0
        %v525 = vsel %vm192, %v178, 0
        %v528 = vsel %vm192, %v179, 0
        %v531 = vsel %vm192, %v180, 0
        %v534 = vsel %vm192, %v181, 0
        %v537 = vsel %vm192, %v182, 0
        %539 = vmatprep.subr.mxu0 0.0
        %540 = vmatpush1.msra.mxu0 0.0
        %541 = vmatprep.subr.mxu0 0.0
        %542 = vmatpush1.msra.mxu0 0.0
        %543 = vmatprep.subr.mxu0 0.0
        %544 = vmatpush1.msra.mxu0 0.0
        %545 = vmatprep.subr.mxu0 0.0
        %546 = vmatpush1.msra.mxu0 0.0
        %547 = vmatprep.subr.mxu0 0.0
        %548 = vmatpush1.msra.mxu0 0.0
        %549 = vmatprep.subr.mxu0 0.0
        %550 = vmatpush1.msra.mxu0 0.0
        %551 = vmatprep.subr.mxu0 0.0
        %552 = vmatpush1.msra.mxu0 0.0
        %553 = vmatprep.subr.mxu0 0.0
        %554 = vmatpush1.msra.mxu0 0.0
        %555 = vmatprep.subr.mxu0 0.0
        %556 = vmatpush1.msra.mxu0 %v376
        %557 = vmatprep.subr.mxu0 0.0
        %558 = vmatpush1.msra.mxu0 %v375
        %559 = vmatprep.subr.mxu0 0.0
        %560 = vmatpush1.msra.mxu0 %v374
        %561 = vmatprep.subr.mxu0 0.0
        %562 = vmatpush1.msra.mxu0 %v373
        %563 = vmatprep.subr.mxu0 0.0
        %564 = vmatpush1.msra.mxu0 %v372
        %565 = vmatprep.subr.mxu0 0.0
        %566 = vmatpush1.msra.mxu0 %v371
        %567 = vmatprep.subr.mxu0 0.0
        %568 = vmatpush1.msra.mxu0 %v370
        %569 = vmatprep.subr.mxu0 0.0
        %570 = vmatpush1.msra.mxu0 %v369
        %571 = vmatprep.subr.mxu0 0.0
        %572 = vmatpush2.msra.mxu0 0.0
        %573 = vmatprep.subr.mxu0 0.0
        %574 = vmatpush2.msra.mxu0 0.0
        %575 = vmatprep.subr.mxu0 0.0
        %576 = vmatpush2.msra.mxu0 0.0
        %577 = vmatprep.subr.mxu0 0.0
        %578 = vmatpush2.msra.mxu0 0.0
        %579 = vmatprep.subr.mxu0 0.0
        %580 = vmatpush2.msra.mxu0 0.0
        %581 = vmatprep.subr.mxu0 0.0
        %582 = vmatpush2.msra.mxu0 0.0
        %583 = vmatprep.subr.mxu0 0.0
        %584 = vmatpush2.msra.mxu0 0.0
        %585 = vmatprep.subr.mxu0 0.0
        %586 = vmatpush2.msra.mxu0 0.0
        %587 = vmatprep.subr.mxu0 0.0
        %588 = vmatpush2.msra.mxu0 0.0
        %589 = vmatprep.subr.mxu0 0.0
        %590 = vmatpush2.msra.mxu0 0.0
        %591 = vmatprep.subr.mxu0 0.0
        %592 = vmatpush2.msra.mxu0 0.0
        %593 = vmatprep.subr.mxu0 0.0
        %594 = vmatpush2.msra.mxu0 0.0
        %595 = vmatprep.subr.mxu0 0.0
        %596 = vmatpush2.msra.mxu0 0.0
        %597 = vmatprep.subr.mxu0 0.0
        %598 = vmatpush2.msra.mxu0 0.0
        %599 = vmatprep.subr.mxu0 0.0
        %600 = vmatpush2.msra.mxu0 0.0
        %601 = vmatprep.subr.mxu0 0.0
        %602 = vmatpush2.msra.mxu0 0.0
        %603 = vmatprep.mubr.f32.mxu0 0.0
        %604 = vmatmul.mubr.f32.gmra.mxu0 %v516
        %v605 = vpop.f32.mrf.mxu0
        %v606 = vadd.f32 %v477, %v605
        %v607 = vpop.f32.mrf.mxu0
        %608 = vmatprep.mubr.f32.mxu0 0.0
        %609 = vmatmul.mubr.f32.gmra.mxu0 %v519
        %v610 = vpop.f32.mrf.mxu0
        %v611 = vadd.f32 %v482, %v610
        %v612 = vpop.f32.mrf.mxu0
        %613 = vmatprep.mubr.f32.mxu0 0.0
        %614 = vmatmul.mubr.f32.gmra.mxu0 %v522
        %v615 = vpop.f32.mrf.mxu0
        %v616 = vadd.f32 %v487, %v615
        %v617 = vpop.f32.mrf.mxu0
        %618 = vmatprep.mubr.f32.mxu0 0.0
        %619 = vmatmul.mubr.f32.gmra.mxu0 %v525
        %v620 = vpop.f32.mrf.mxu0
        %v621 = vadd.f32 %v492, %v620
        %v622 = vpop.f32.mrf.mxu0
        %623 = vmatprep.mubr.f32.mxu0 0.0
        %624 = vmatmul.mubr.f32.gmra.mxu0 %v528
        %v625 = vpop.f32.mrf.mxu0
        %v626 = vadd.f32 %v497, %v625
        %v627 = vpop.f32.mrf.mxu0
        %628 = vmatprep.mubr.f32.mxu0 0.0
        %629 = vmatmul.mubr.f32.gmra.mxu0 %v531
        %v630 = vpop.f32.mrf.mxu0
        %v631 = vadd.f32 %v502, %v630
        %v632 = vpop.f32.mrf.mxu0
        %633 = vmatprep.mubr.f32.mxu0 0.0
        %634 = vmatmul.mubr.f32.gmra.mxu0 %v534
        %v635 = vpop.f32.mrf.mxu0
        %v636 = vadd.f32 %v507, %v635
        %v637 = vpop.f32.mrf.mxu0
        %638 = vmatprep.mubr.f32.mxu0 0.0
        %639 = vmatmul.mubr.f32.gmra.mxu0 %v537
        %v640 = vpop.f32.mrf.mxu0
        %v641 = vadd.f32 %v512, %v640
        %v642 = vpop.f32.mrf.mxu0
        %643 = vdwg.mxu0
        %v644 = vld [vmem:[%s2] sm:$0x1]
        %v645 = vld [vmem:[%s2 + $0x1] sm:$0x1]
        %v646 = vlaneseq
        %v647 = vshrl.u32 %v646, 7
        %v648 = vsub.s32 0, %v647
        %v649 = vrot.slane %v644, %v648
        %v650 = vmul.f32 %v321, %v649
        %v651 = vmul.f32 %v322, %v649
        %v652 = vmul.f32 %v323, %v649
        %v653 = vmul.f32 %v324, %v649
        %v654 = vmul.f32 %v325, %v649
        %v655 = vmul.f32 %v326, %v649
        %v656 = vmul.f32 %v327, %v649
        %v657 = vmul.f32 %v328, %v649
        %v658 = vsub.f32 %v606, %v650
        %v659 = vsub.f32 %v611, %v651
        %v660 = vsub.f32 %v616, %v652
        %v661 = vsub.f32 %v621, %v653
        %v662 = vsub.f32 %v626, %v654
        %v663 = vsub.f32 %v631, %v655
        %v664 = vsub.f32 %v636, %v656
        %v665 = vsub.f32 %v641, %v657
        %v666 = vmul.f32 %v658, %v361
        %v667 = vmul.f32 %v659, %v362
        %v668 = vmul.f32 %v660, %v363
        %v669 = vmul.f32 %v661, %v364
        %v670 = vmul.f32 %v662, %v365
        %v671 = vmul.f32 %v663, %v366
        %v672 = vmul.f32 %v664, %v367
        %v673 = vmul.f32 %v665, %v368
        %v674 = vlaneseq
        %v675 = vshrl.u32 %v674, 7
        %v676 = vsub.s32 0, %v675
        %v677 = vrot.slane %v645, %v676
        %v678 = vadd.f32 %v666, %v677
        %v679 = vadd.f32 %v667, %v677
        %v680 = vadd.f32 %v668, %v677
        %v681 = vadd.f32 %v669, %v677
        %v682 = vadd.f32 %v670, %v677
        %v683 = vadd.f32 %v671, %v677
        %v684 = vadd.f32 %v672, %v677
        %v685 = vadd.f32 %v673, %v677
        %686 = vst.msk [vmem:[%s166] sm:$0xff] %vm192, %v678
        %687 = vst.msk [vmem:[%s166 + $0x8] sm:$0xff] %vm192, %v679
        %688 = vst.msk [vmem:[%s166 + $0x10] sm:$0xff] %vm192, %v680
        %689 = vst.msk [vmem:[%s166 + $0x18] sm:$0xff] %vm192, %v681
        %690 = vst.msk [vmem:[%s166 + $0x20] sm:$0xff] %vm192, %v682
        %691 = vst.msk [vmem:[%s166 + $0x28] sm:$0xff] %vm192, %v683
        %692 = vst.msk [vmem:[%s166 + $0x30] sm:$0xff] %vm192, %v684
        %693 = vst.msk [vmem:[%s166 + $0x38] sm:$0xff] %vm192, %v685
        %s694 = sand.u32 %s93, 1
        %s695 = scalar_lea.sflag [#allocation3], %s694
        %s696 = sand.u32 %s93, 1
        %s697 = smul.addr %s696, 64
        %s698 = scalar_lea.vmem [#allocation2], %s697
        // Predicated region
        $region33: #{patch_merging.1} parent=31 // pred_check
          %p699 = pneg %p103
        $region34: #{patch_merging.1} parent=31 // pred_check_branch
          %701 = sbr.rel (%p699) target = $region36
        $region35: #{patch_merging.1} parent=31 // pred_region
          %s702 = smul.u32 8, %s17
          %s704 = ssub.s32 1024, 1024
          %705 = vsyncadd %s695, %s704
          %s706 = smul.addr %s702, 128
          %s707 = scalar_lea.hbm %s3, %s706
          %s708 = sshll.u32 %s698, 4
          %s709 = int_to_ptr.vmem [resolvable:$true] %s708
          %714 = dma.vmem_to_hbm [thread:$0]  %s709, 1024, %s707, %s695, 128, 128, 8
        $region36: #{patch_merging.1} parent=31 // pred_fallthru
          _
      $region32: #{patch_merging.1} parent=5 // pred_fallthru
        _
      %p715 = scmp.le.s32.totalorder 2, %s12
      // Predicated region
      $region37: #{patch_merging.1} parent=5 // pred_check
        %p716 = pneg %p715
      $region38: #{patch_merging.1} parent=5 // pred_check_branch
        %718 = sbr.rel (%p716) target = $region40
      $region39: #{patch_merging.1} parent=5 // pred_region
        %s719 = ssub.s32 %s12, 2
        // Predicated region
        $region41: #{patch_merging.1} parent=39 // pred_check
          %p720 = pneg %p109
        $region42: #{patch_merging.1} parent=39 // pred_check_branch
          %722 = sbr.rel (%p720) target = $region44
        $region43: #{patch_merging.1} parent=39 // pred_region
          %s723 = sand.u32 %s94, 1
          %s724 = scalar_lea.sflag [#allocation3], %s723
          %s725 = sand.u32 %s94, 1
          %s726 = smul.addr %s725, 64
          %s727 = scalar_lea.vmem [#allocation2], %s726
          %728 = dma.done %s724, 1024
        $region44: #{patch_merging.1} parent=39 // pred_fallthru
          _
      $region40: #{patch_merging.1} parent=5 // pred_fallthru
        _
    $region6: #{patch_merging.1} parent=1 // loop_footer
      %s16 = sadd.s32 1, %s12
    $region7: #{patch_merging.1} parent=1 // loop_footer_branch
      %11 = sbr.rel target = $region3
    $region8: #{patch_merging.1} parent=1 // loop_exit
      _
    %729 = vsyncpa [#allocation3], 1
    %s730 = scalar_lea.sflag [#allocation3], 1
    %731 = vsyncpa %s730, 1

</llo_original>
